<compile_context>
chip_gen: v6e
topology: v6e:2x2x1
jax: 0.10.0
libtpu: 0.0.40
codegen_flags: <defaults>
</compile_context>

<pallas_src>
import functools

import jax
import jax.numpy as jnp
from jax import lax
from jax.experimental import pallas as pl
from jax.experimental.pallas import tpu as pltpu

ALPHA = 0.8
GAMMA = 2

_LANES = 128
_SUBLANES = 8
_ROW_TILE_ELEMS = _SUBLANES * _LANES          # 1024
_DEFAULT_BLOCK_ROWS = 8192                    # (8192,128) f32 = 4 MiB / input / buffer


def _round_up(v, m):
    return ((v + m - 1) // m) * m


def _sigmoid_f32(x):
    # Same expression in kernel and reference. For f32 this matches torch's
    # F.sigmoid (saturates to exactly 0 / 1 for very large |x|); torch's
    # clamp(min=0, max=1) on a sigmoid output is a numerical no-op, so skipped.
    return 1.0 / (1.0 + jnp.exp(-x))


def _bce_partial_kernel(x_ref, t_ref, partial_ref, *,
                        block_rows, num_minor, valid_rows):
    """Accumulates per-(sublane, lane) partial sums of the element-wise BCE."""
    mj = pl.program_id(0)   # "parallel" axis (both TCs on v7x)
    mi = pl.program_id(1)   # "arbitrary" reduction axis

    @pl.when(mi == 0)
    def _():
        partial_ref[...] = jnp.zeros_like(partial_ref)

    x = x_ref[...].astype(jnp.float32)
    t = t_ref[...].astype(jnp.float32)

    # Exact PyTorch path: p = sigmoid(x); BCE with both log terms clamped at -100
    # (F.binary_cross_entropy semantics). General soft-label form is kept on
    # purpose; the where()-select trick is only valid for hard 0/1 targets.
    p = _sigmoid_f32(x)
    log_p = jnp.maximum(jnp.log(p), -100.0)
    log_1mp = jnp.maximum(jnp.log(1.0 - p), -100.0)
    bce = -(t * log_p + (1.0 - t) * log_1mp)

    def _accumulate(vals):
        # (rows,128) -> (rows//8, 8, 128) is tile-preserving; axis-0 reduce is
        # plain full-vreg VPU adds into the resident lane-dense output block.
        partial_ref[...] += jnp.sum(
            vals.reshape(block_rows // _SUBLANES, _SUBLANES, _LANES), axis=0
        )[None, :, :]

    block_idx = mj * num_minor + mi            # logical block index
    block_start = block_idx * block_rows       # first global row of this block
    needs_mask = block_start + block_rows > valid_rows

    @pl.when(jnp.logical_not(needs_mask))
    def _():                                   # hot path: no masking work
        _accumulate(bce)

    @pl.when(needs_mask)
    def _():                                   # partial edge block / phantom block
        row_ids = block_start + lax.broadcasted_iota(
            jnp.int32, (block_rows, _LANES), 0)
        _accumulate(jnp.where(row_ids < valid_rows, bce, 0.0))


def focal_loss(inputs, targets, alpha=ALPHA, gamma=GAMMA,
               block_rows=_DEFAULT_BLOCK_ROWS):
    """Pallas TPU implementation of FocalLoss.forward. Returns a scalar f32."""
    x = jnp.reshape(inputs, (-1,))
    t = jnp.reshape(targets, (-1,))
    n = x.shape[0]

    # Pad only up to 8*128 alignment (<=1023 elements) so the (rows,128) reshape
    # is legal and rows is sublane-aligned. Neutral values (logit -1e4, target 0)
    # contribute exactly 0 to the BCE sum. SAM-style masks (H*W multiple of 1024)
    # never take this branch, so the kernel stays single-pass over HBM.
    n_pad = _round_up(max(n, _ROW_TILE_ELEMS), _ROW_TILE_ELEMS)
    pad = n_pad - n
    if pad:
        x = jnp.concatenate([x, jnp.full((pad,), -1e4, dtype=x.dtype)])
        t = jnp.concatenate([t, jnp.zeros((pad,), dtype=t.dtype)])

    rows = n_pad // _LANES                     # multiple of 8
    x2 = x.reshape(rows, _LANES)
    t2 = t.reshape(rows, _LANES)

    block_rows = int(min(block_rows, rows))
    block_rows = _round_up(block_rows, _SUBLANES)
    total_blocks = pl.cdiv(rows, block_rows)

    # Leading ("parallel") axis: always 2 when possible, so both v7x TensorCores
    # run even for odd block counts. Any phantom logical block is clamped to a
    # valid data block by the index_map and fully masked in-kernel.
    num_major = 2 if total_blocks >= 2 else 1
    num_minor = pl.cdiv(total_blocks, num_major)

    def in_map(mj, mi):
        lbi = mj * num_minor + mi
        return (jnp.minimum(lbi, total_blocks - 1), 0)

    kernel = functools.partial(
        _bce_partial_kernel,
        block_rows=block_rows, num_minor=num_minor, valid_rows=rows)

    out_bytes = num_major * _SUBLANES * _LANES * 4
    bytes_accessed = (x2.size * x2.dtype.itemsize
                      + t2.size * t2.dtype.itemsize + out_bytes)

    partials = pl.pallas_call(
        kernel,
        out_shape=jax.ShapeDtypeStruct((num_major, _SUBLANES, _LANES), jnp.float32),
        grid_spec=pltpu.PrefetchScalarGridSpec(
            num_scalar_prefetch=0,
            grid=(num_major, num_minor),
            in_specs=[
                pl.BlockSpec((block_rows, _LANES), in_map),
                pl.BlockSpec((block_rows, _LANES), in_map),
            ],
            out_specs=pl.BlockSpec(
                (1, _SUBLANES, _LANES), lambda mj, mi: (mj, 0, 0)
            ),
        ),
        compiler_params=pltpu.CompilerParams(
            dimension_semantics=("parallel", "arbitrary"),
            vmem_limit_bytes=48 * 1024 * 1024,
        ),
        cost_estimate=pl.CostEstimate(
            flops=10 * n_pad,
            transcendentals=3 * n_pad,
            bytes_accessed=bytes_accessed,
        ),
    )(x2, t2)

    # Tiny scalar epilogue (mean + focal modulation) in plain JAX.
    bce_mean = jnp.sum(partials) / jnp.float32(n)
    bce_exp = jnp.exp(-bce_mean)
    mod = 1.0 - bce_exp
    if isinstance(gamma, (int, float)) and gamma == 2:
        focal = alpha * (mod * mod) * bce_mean   # avoid pow for the default gamma
    else:
        focal = alpha * (mod ** gamma) * bce_mean
    return focal


def _focal_loss_ref(inputs, targets, alpha=ALPHA, gamma=GAMMA):
    """Pure-JAX reference matching the PyTorch module's formulation."""
    p = _sigmoid_f32(inputs.astype(jnp.float32)).reshape(-1)
    t = targets.astype(jnp.float32).reshape(-1)
    log_p = jnp.maximum(jnp.log(p), -100.0)
    log_1mp = jnp.maximum(jnp.log(1.0 - p), -100.0)
    bce = jnp.mean(-(t * log_p + (1.0 - t) * log_1mp))
    bce_exp = jnp.exp(-bce)
    return alpha * (1.0 - bce_exp) ** gamma * bce


if __name__ == "__main__":
    key = jax.random.PRNGKey(0)
    keys = jax.random.split(key, 8)

    def _check(x, t, **kw):
        loss = focal_loss(x, t, **kw)
        jax.block_until_ready(loss)
        ref = _focal_loss_ref(x, t)
        assert jnp.allclose(loss, ref, rtol=1e-4, atol=1e-6), (loss, ref)

    # SAM-style (B, 1, H, W) logits / binary masks; no padding path.
    x = jax.random.normal(keys[0], (2, 1, 16, 16), dtype=jnp.float32) * 3.0
    t = (jax.random.uniform(keys[1], (2, 1, 16, 16)) > 0.5).astype(jnp.float32)
    _check(x, t)

    # Multi-block path with an even block count -> both parallel lanes, no masking.
    x = jax.random.normal(keys[2], (2, 1, 32, 128), dtype=jnp.float32) * 3.0
    t = (jax.random.uniform(keys[3], (2, 1, 32, 128)) > 0.5).astype(jnp.float32)
    _check(x, t, block_rows=16)

    # Odd block count + partial final block -> exercises the in-kernel row mask
    # and the clamped "phantom" block on the second parallel lane.
    x = jax.random.normal(keys[4], (1, 1, 40, 128), dtype=jnp.float32) * 3.0
    t = (jax.random.uniform(keys[5], (1, 1, 40, 128)) > 0.5).astype(jnp.float32)
    _check(x, t, block_rows=16)

    # Ragged element count (not a multiple of 1024) -> neutral alignment pad.
    x = jax.random.normal(keys[6], (1, 1, 10, 10), dtype=jnp.float32) * 3.0
    t = (jax.random.uniform(keys[7], (1, 1, 10, 10)) > 0.5).astype(jnp.float32)
    _check(x, t)

    # Native bf16 logits (bandwidth-friendly caller contract) vs f32 targets.
    xb = (jax.random.normal(keys[0], (2, 1, 16, 128), dtype=jnp.float32) * 3.0
          ).astype(jnp.bfloat16)
    tb = (jax.random.uniform(keys[1], (2, 1, 16, 128)) > 0.5).astype(jnp.float32)
    _check(xb, tb)

    print("KERNEL_OK")
</pallas_src>

<mosaic_0001>
module attributes {stable_mosaic.version = 11 : i64} {
  func.func @_bce_partial_kernel(%arg0: i32, %arg1: i32, %arg2: memref<8x128xf32, #tpu.memory_space<vmem>>, %arg3: memref<8x128xf32, #tpu.memory_space<vmem>>, %arg4: memref<1x8x128xf32, #tpu.memory_space<vmem>>) attributes {dimension_semantics = [#tpu.dimension_semantics<parallel>, #tpu.dimension_semantics<arbitrary>], iteration_bounds = array<i64: 1, 1>, scalar_prefetch = 0 : i64, scratch_operands = 0 : i64, tpu.core_type = #tpu.core_type<tc>, window_params = [{transform_indices = @transform_0, window_bounds = array<i64: 8, 128>}, {transform_indices = @transform_1, window_bounds = array<i64: 8, 128>}, {transform_indices = @transform_2, window_bounds = array<i64: 1, 8, 128>}]} {
    %c0_i32 = arith.constant 0 : i32
    %0 = arith.cmpi eq, %arg1, %c0_i32 : i32
    %1 = arith.extui %0 : i1 to i32
    %c0_i32_0 = arith.constant 0 : i32
    %2 = arith.cmpi ne, %1, %c0_i32_0 : i32
    scf.if %2 {
      %cst_15 = arith.constant 0.000000e+00 : f32
      %37 = vector.broadcast %cst_15 : f32 to vector<1x8x128xf32>
      %c0_16 = arith.constant 0 : index
      %c0_17 = arith.constant 0 : index
      %c0_18 = arith.constant 0 : index
      %38 = vector.load %arg4[%c0_16, %c0_17, %c0_18] : memref<1x8x128xf32, #tpu.memory_space<vmem>>, vector<1x8x128xf32>
      tpu.vector_store %arg4[%c0_16, %c0_17, %c0_18], %37 {strides = array<i32>} : memref<1x8x128xf32, #tpu.memory_space<vmem>>, vector<1x8x128xf32>,
    } else {
    }
    %c0 = arith.constant 0 : index
    %c0_1 = arith.constant 0 : index
    %3 = vector.load %arg2[%c0, %c0_1] : memref<8x128xf32, #tpu.memory_space<vmem>>, vector<8x128xf32>
    %c0_2 = arith.constant 0 : index
    %c0_3 = arith.constant 0 : index
    %4 = vector.load %arg3[%c0_2, %c0_3] : memref<8x128xf32, #tpu.memory_space<vmem>>, vector<8x128xf32>
    %cst = arith.constant 0.000000e+00 : f32
    %5 = vector.broadcast %cst : f32 to vector<8x128xf32>
    %6 = arith.subf %5, %3 : vector<8x128xf32>
    %7 = math.exp %6 : vector<8x128xf32>
    %cst_4 = arith.constant 1.000000e+00 : f32
    %8 = vector.broadcast %cst_4 : f32 to vector<8x128xf32>
    %9 = arith.addf %8, %7 : vector<8x128xf32>
    %cst_5 = arith.constant 1.000000e+00 : f32
    %10 = vector.broadcast %cst_5 : f32 to vector<8x128xf32>
    %11 = arith.divf %10, %9 : vector<8x128xf32>
    %12 = math.log %11 : vector<8x128xf32>
    %cst_6 = arith.constant -1.000000e+02 : f32
    %13 = vector.broadcast %cst_6 : f32 to vector<8x128xf32>
    %14 = arith.maximumf %12, %13 : vector<8x128xf32>
    %cst_7 = arith.constant 1.000000e+00 : f32
    %15 = vector.broadcast %cst_7 : f32 to vector<8x128xf32>
    %16 = arith.subf %15, %11 : vector<8x128xf32>
    %17 = math.log %16 : vector<8x128xf32>
    %cst_8 = arith.constant -1.000000e+02 : f32
    %18 = vector.broadcast %cst_8 : f32 to vector<8x128xf32>
    %19 = arith.maximumf %17, %18 : vector<8x128xf32>
    %20 = arith.mulf %4, %14 : vector<8x128xf32>
    %cst_9 = arith.constant 1.000000e+00 : f32
    %21 = vector.broadcast %cst_9 : f32 to vector<8x128xf32>
    %22 = arith.subf %21, %4 : vector<8x128xf32>
    %23 = arith.mulf %22, %19 : vector<8x128xf32>
    %24 = arith.addf %20, %23 : vector<8x128xf32>
    %cst_10 = arith.constant 0.000000e+00 : f32
    %25 = vector.broadcast %cst_10 : f32 to vector<8x128xf32>
    %26 = arith.subf %25, %24 : vector<8x128xf32>
    %c1_i32 = arith.constant 1 : i32
    %27 = arith.muli %arg0, %c1_i32 : i32
    %28 = arith.addi %27, %arg1 : i32
    %c8_i32 = arith.constant 8 : i32
    %29 = arith.muli %28, %c8_i32 : i32
    %c8_i32_11 = arith.constant 8 : i32
    %30 = arith.addi %29, %c8_i32_11 : i32
    %c8_i32_12 = arith.constant 8 : i32
    %31 = arith.cmpi sgt, %30, %c8_i32_12 : i32
    %true = arith.constant true
    %32 = arith.xori %31, %true : i1
    %33 = arith.extui %32 : i1 to i32
    %c0_i32_13 = arith.constant 0 : i32
    %34 = arith.cmpi ne, %33, %c0_i32_13 : i32
    scf.if %34 {
      %c0_15 = arith.constant 0 : index
      %c0_16 = arith.constant 0 : index
      %c0_17 = arith.constant 0 : index
      %37 = vector.load %arg4[%c0_15, %c0_16, %c0_17] : memref<1x8x128xf32, #tpu.memory_space<vmem>>, vector<1x8x128xf32>
      %38 = vector.shape_cast %26 : vector<8x128xf32> to vector<1x8x128xf32>
      %cst_18 = arith.constant dense<0.000000e+00> : vector<8x128xf32>
      %39 = vector.multi_reduction <add>, %38, %cst_18 [0] : vector<1x8x128xf32> to vector<8x128xf32>
      %40 = vector.shape_cast %39 : vector<8x128xf32> to vector<1x8x128xf32>
      %41 = arith.addf %37, %40 : vector<1x8x128xf32>
      %c0_19 = arith.constant 0 : index
      %c0_20 = arith.constant 0 : index
      %c0_21 = arith.constant 0 : index
      %42 = vector.load %arg4[%c0_19, %c0_20, %c0_21] : memref<1x8x128xf32, #tpu.memory_space<vmem>>, vector<1x8x128xf32>
      tpu.vector_store %arg4[%c0_19, %c0_20, %c0_21], %41 {strides = array<i32>} : memref<1x8x128xf32, #tpu.memory_space<vmem>>, vector<1x8x128xf32>,
    } else {
    }
    %35 = arith.extui %31 : i1 to i32
    %c0_i32_14 = arith.constant 0 : i32
    %36 = arith.cmpi ne, %35, %c0_i32_14 : i32
    scf.if %36 {
      %37 = tpu.iota {dimensions = array<i32: 0>} : vector<8x128xi32>
      %38 = vector.broadcast %29 : i32 to vector<8x128xi32>
      %39 = arith.addi %38, %37 : vector<8x128xi32>
      %c8_i32_15 = arith.constant 8 : i32
      %40 = vector.broadcast %c8_i32_15 : i32 to vector<8x128xi32>
      %41 = arith.cmpi slt, %39, %40 : vector<8x128xi32>
      %cst_16 = arith.constant 0.000000e+00 : f32
      %42 = vector.broadcast %cst_16 : f32 to vector<8x128xf32>
      %43 = arith.select %41, %26, %42 : vector<8x128xi1>, vector<8x128xf32>
      %c0_17 = arith.constant 0 : index
      %c0_18 = arith.constant 0 : index
      %c0_19 = arith.constant 0 : index
      %44 = vector.load %arg4[%c0_17, %c0_18, %c0_19] : memref<1x8x128xf32, #tpu.memory_space<vmem>>, vector<1x8x128xf32>
      %45 = vector.shape_cast %43 : vector<8x128xf32> to vector<1x8x128xf32>
      %cst_20 = arith.constant dense<0.000000e+00> : vector<8x128xf32>
      %46 = vector.multi_reduction <add>, %45, %cst_20 [0] : vector<1x8x128xf32> to vector<8x128xf32>
      %47 = vector.shape_cast %46 : vector<8x128xf32> to vector<1x8x128xf32>
      %48 = arith.addf %44, %47 : vector<1x8x128xf32>
      %c0_21 = arith.constant 0 : index
      %c0_22 = arith.constant 0 : index
      %c0_23 = arith.constant 0 : index
      %49 = vector.load %arg4[%c0_21, %c0_22, %c0_23] : memref<1x8x128xf32, #tpu.memory_space<vmem>>, vector<1x8x128xf32>
      tpu.vector_store %arg4[%c0_21, %c0_22, %c0_23], %48 {strides = array<i32>} : memref<1x8x128xf32, #tpu.memory_space<vmem>>, vector<1x8x128xf32>,
    } else {
    }
    return
  }
  func.func @transform_0(%arg0: i32, %arg1: i32) -> (i32, i32) {
    %c1_i32 = arith.constant 1 : i32
    %0 = arith.muli %arg0, %c1_i32 : i32
    %1 = arith.addi %0, %arg1 : i32
    %c0_i32 = arith.constant 0 : i32
    %2 = arith.minsi %1, %c0_i32 : i32
    %c0_i32_0 = arith.constant 0 : i32
    %c0_i32_1 = arith.constant 0 : i32
    return %2, %c0_i32_0 : i32, i32
  }
  func.func @transform_1(%arg0: i32, %arg1: i32) -> (i32, i32) {
    %c1_i32 = arith.constant 1 : i32
    %0 = arith.muli %arg0, %c1_i32 : i32
    %1 = arith.addi %0, %arg1 : i32
    %c0_i32 = arith.constant 0 : i32
    %2 = arith.minsi %1, %c0_i32 : i32
    %c0_i32_0 = arith.constant 0 : i32
    %c0_i32_1 = arith.constant 0 : i32
    return %2, %c0_i32_0 : i32, i32
  }
  func.func @transform_2(%arg0: i32, %arg1: i32) -> (i32, i32, i32) {
    %c0_i32 = arith.constant 0 : i32
    %c0_i32_0 = arith.constant 0 : i32
    %c0_i32_1 = arith.constant 0 : i32
    return %arg0, %c0_i32, %c0_i32_0 : i32, i32, i32
  }
}

</mosaic_0001>

<llo_original>
// kernel: tpu_custom_call.1
$region0: #{tpu_custom_call.1}
  #allocation0 [shape = 'u32[]', space=smem, size = 0x4, offset = 0x4, fixed_abs, tag = 'smem constant byte address 0x4 - core index']
  #allocation1 [shape = 'u32[144,128]{1,0:T(1,128)}', space=vmem, size = 0x12000, scoped, tag = 'internal scratch']
  %s0 = inlined_call_operand.hbm [shape: f32[8,128], index: 0, kind: input, shape index: {}]
  %s1 = inlined_call_operand.hbm [shape: f32[8,128], index: 1, kind: input, shape index: {}]
  %s2 = inlined_call_operand.hbm [shape: f32[1,8,128], index: 2, kind: output, shape index: {}]
  %s3 = sld [smem:[#allocation0]]
  $region38: #{tpu_custom_call.1} parent=0
    _
  %s5 = ssub.s32 1, %s3
  %s6 = scalar_select 0, %s5, %s3
  $region1: #{tpu_custom_call.1} parent=0
    #allocation2 [shape = 'u8[4096]{0}', space=vmem, size = 0x1000, scoped, tag = 'input window, operand 0, single buffered']
    #allocation3 [shape = 's32[1]{0}', space=sflag, size = 0x4, scoped, tag = 'scoped memory for tpu_custom_call.1']
    #allocation4 [shape = 's32[1]{0}', space=sflag, size = 0x4, scoped, tag = 'scoped memory for tpu_custom_call.1']
    #allocation5 [shape = 'u8[4096]{0}', space=vmem, size = 0x1000, scoped, tag = 'input window, operand 1, single buffered']
    #allocation6 [shape = 's32[1]{0}', space=sflag, size = 0x4, scoped, tag = 'scoped memory for tpu_custom_call.1']
    #allocation7 [shape = 'u8[4096]{0}', space=vmem, size = 0x1000, scoped, tag = 'output window, operand 0, single buffered']
    %7 = vsyncpa [#allocation3], 0
    %8 = vsyncpa [#allocation6], 0
    %9 = vsyncpa [#allocation4], 0
    // Predicated region
    $region2: #{tpu_custom_call.1} parent=1 // pred_check
      _
    $region3: #{tpu_custom_call.1} parent=1 // pred_check_branch
      %11 = sbr.rel (0) target = $region5
    $region4: #{tpu_custom_call.1} parent=1 // pred_region
      %s12 = sadd.s32 0, 0
      %p13 = scmp.lt.s32.totalorder %s12, 0
      %s14 = scalar_select %p13, %s12, 0
      %s16 = ssub.s32 128, 128
      %17 = vsyncadd [#allocation3], %s16
      %s18 = smul.addr %s14, 128
      %s19 = scalar_lea.hbm %s0, %s18
      %s21 = sshll.u32 [#allocation2], 4
      %s22 = int_to_ptr.vmem [resolvable:$true] %s21
      %24 = dma.hbm_to_vmem [thread:$0]  %s19, 128, %s22, [#allocation3]
    $region5: #{tpu_custom_call.1} parent=1 // pred_fallthru
      _
    // Predicated region
    $region6: #{tpu_custom_call.1} parent=1 // pred_check
      _
    $region7: #{tpu_custom_call.1} parent=1 // pred_check_branch
      %26 = sbr.rel (0) target = $region9
    $region8: #{tpu_custom_call.1} parent=1 // pred_region
      %s27 = sadd.s32 0, 0
      %p28 = scmp.lt.s32.totalorder %s27, 0
      %s29 = scalar_select %p28, %s27, 0
      %s31 = ssub.s32 128, 128
      %32 = vsyncadd [#allocation6], %s31
      %s33 = smul.addr %s29, 128
      %s34 = scalar_lea.hbm %s1, %s33
      %s36 = sshll.u32 [#allocation5], 4
      %s37 = int_to_ptr.vmem [resolvable:$true] %s36
      %39 = dma.hbm_to_vmem [thread:$0]  %s34, 128, %s37, [#allocation6]
    $region9: #{tpu_custom_call.1} parent=1 // pred_fallthru
      _
    // Predicated region
    $region10: #{tpu_custom_call.1} parent=1 // pred_check
      _
    $region11: #{tpu_custom_call.1} parent=1 // pred_check_branch
      %41 = sbr.rel (0) target = $region13
    $region12: #{tpu_custom_call.1} parent=1 // pred_region
      %42 = dma.done [#allocation3], 128
    $region13: #{tpu_custom_call.1} parent=1 // pred_fallthru
      _
    // Predicated region
    $region14: #{tpu_custom_call.1} parent=1 // pred_check
      _
    $region15: #{tpu_custom_call.1} parent=1 // pred_check_branch
      %44 = sbr.rel (0) target = $region17
    $region16: #{tpu_custom_call.1} parent=1 // pred_region
      %45 = dma.done [#allocation6], 128
    $region17: #{tpu_custom_call.1} parent=1 // pred_fallthru
      _
    %s46 = sadd.s32 0, 0
    %p47 = scmp.lt.s32.totalorder %s46, 0
    %s48 = scalar_select %p47, %s46, 0
    %s49 = sadd.s32 0, 0
    %p50 = scmp.lt.s32.totalorder %s49, 0
    %s51 = scalar_select %p50, %s49, 0
    %p52 = scmp.eq.s32.totalorder 0, 0
    // Predicated region
    $region18: #{tpu_custom_call.1} parent=1 // pred_check
      %p53 = pneg %p52
    $region19: #{tpu_custom_call.1} parent=1 // pred_check_branch
      %55 = sbr.rel (%p53) target = $region21
    $region20: #{tpu_custom_call.1} parent=1 // pred_region
      %56 = vst [vmem:[#allocation7] sm:$0xff] 0.0
    $region21: #{tpu_custom_call.1} parent=1 // pred_fallthru
      _
    %v57 = vld [vmem:[#allocation2] sm:$0xff]
    %v58 = vld [vmem:[#allocation5] sm:$0xff]
    %v59 = vsub.f32 0.0, %v57
    %v60 = vmul.f32 %v59, 1.442695
    %v61 = vpow.pop %v60
    %v62 = vadd.f32 %v61, 1.0
    %v63 = vrcp.pop %v62
    %v64 = vmul.f32 1.0, %v63
    %v65 = vlog2.pop %v64
    %v66 = vmul.f32 %v65, 0.6931472
    %v67 = vmax.f32 %v66, -100.0
    %v68 = vsub.f32 1.0, %v64
    %v69 = vlog2.pop %v68
    %v70 = vmul.f32 %v69, 0.6931472
    %v71 = vmax.f32 %v70, -100.0
    %v72 = vmul.f32 %v58, %v67
    %v73 = vsub.f32 1.0, %v58
    %v74 = vmul.f32 %v73, %v71
    %v75 = vadd.f32 %v72, %v74
    %v76 = vsub.f32 0.0, %v75
    %s77 = sadd.s32 0, 0
    %s78 = smul.u32 %s77, 8
    %s79 = sadd.s32 %s78, 8
    %p80 = scmp.gt.s32.totalorder %s79, 8
    %p81 = scmp.le.s32.totalorder %s79, 8
    // Predicated region
    $region22: #{tpu_custom_call.1} parent=1 // pred_check
      %p82 = pneg %p81
    $region23: #{tpu_custom_call.1} parent=1 // pred_check_branch
      %84 = sbr.rel (%p82) target = $region25
    $region24: #{tpu_custom_call.1} parent=1 // pred_region
      %v85 = vld [vmem:[#allocation7] sm:$0xff]
      %v86 = vadd.f32 %v76, 0.0
      %v87 = vadd.f32 %v85, %v86
      %88 = vst [vmem:[#allocation7] sm:$0xff] %v87
    $region25: #{tpu_custom_call.1} parent=1 // pred_fallthru
      _
    // Predicated region
    $region26: #{tpu_custom_call.1} parent=1 // pred_check
      %p89 = pneg %p80
    $region27: #{tpu_custom_call.1} parent=1 // pred_check_branch
      %91 = sbr.rel (%p89) target = $region29
    $region28: #{tpu_custom_call.1} parent=1 // pred_region
      %v92 = vlaneseq
      %v93 = vshrl.u32 %v92, 7
      %v94 = vstv %s78
      %v95 = vadd.s32 %v94, %v93
      %vm96 = vcmp.lt.s32.totalorder %v95, 8
      %v97 = vsel %vm96, %v76, 0.0
      %v98 = vld [vmem:[#allocation7] sm:$0xff]
      %v99 = vadd.f32 %v97, 0.0
      %v100 = vadd.f32 %v98, %v99
      %101 = vst [vmem:[#allocation7] sm:$0xff] %v100
    $region29: #{tpu_custom_call.1} parent=1 // pred_fallthru
      _
    // Predicated region
    $region30: #{tpu_custom_call.1} parent=1 // pred_check
      _
    $region31: #{tpu_custom_call.1} parent=1 // pred_check_branch
      %103 = sbr.rel (0) target = $region33
    $region32: #{tpu_custom_call.1} parent=1 // pred_region
      %s105 = ssub.s32 128, 128
      %106 = vsyncadd [#allocation4], %s105
      %s108 = sshll.u32 [#allocation7], 4
      %s109 = int_to_ptr.vmem [resolvable:$true] %s108
      %111 = dma.vmem_to_hbm [thread:$0]  %s109, 128, %s2, [#allocation4]
    $region33: #{tpu_custom_call.1} parent=1 // pred_fallthru
      _
    // Predicated region
    $region34: #{tpu_custom_call.1} parent=1 // pred_check
      _
    $region35: #{tpu_custom_call.1} parent=1 // pred_check_branch
      %113 = sbr.rel (0) target = $region37
    $region36: #{tpu_custom_call.1} parent=1 // pred_region
      %114 = dma.done [#allocation4], 128
    $region37: #{tpu_custom_call.1} parent=1 // pred_fallthru
      _
    %115 = vsyncpa [#allocation3], 1
    %116 = vsyncpa [#allocation6], 1
    %117 = vsyncpa [#allocation4], 1

</llo_original>
